<compile_context>
chip_gen: v7x
topology: tpu7x:2x2x1
jax: 0.10.0
libtpu: 0.0.40
codegen_flags: <defaults>
</compile_context>

<pallas_src>
import jax
import jax.numpy as jnp
from jax.experimental import pallas as pl
from jax.experimental.pallas import tpu as pltpu

_LANES = 128


def _predict_kernel(a_ref, b_ref, seg_ref, out_ref):
    """Per batch tile: out[r, g] = sum_j |b[r, g*H + j] - a[r, g*H + j]|.

    a_ref/b_ref: (tb, group*H) lane-packed f32 tiles.
    seg_ref:     (group*H, group) constant 0/1 segment-sum matrix.
    out_ref:     (tb, group) f32.
    |b - a| on the VPU; segmented lane reduction via one tiny matmul on the idle MXU.
    """
    diff = jnp.abs(b_ref[...] - a_ref[...])                       # (tb, group*H)  VPU
    out_ref[...] = jnp.dot(diff, seg_ref[...],
                           preferred_element_type=jnp.float32)    # (tb, group)    MXU


def gnn_embedder_forward(emb_as, emb_bs):
    """GnnEmbedder.forward: returns the embedding pair unchanged (pass-through)."""
    return (emb_as, emb_bs)


def gnn_embedder_predict(pred, *, tb_rows=2048, min_pallas_batch=2048,
                         force_pallas=False, core_parallel=False):
    """GnnEmbedder.predict: e[i] = sum_j |emb_bs[i, j] - emb_as[i, j]|.

    pred: (emb_as, emb_bs), each [B, H].  Returns e: [B] float32.
    """
    emb_as, emb_bs = pred
    B, H = emb_as.shape
    assert emb_bs.shape == (B, H)
    emb_as = emb_as.astype(jnp.float32)
    emb_bs = emb_bs.astype(jnp.float32)

    # Tiny batches: skip the custom call entirely (fixed DMA/grid-step cost dwarfs
    # the work); XLA fuses this into one cheap elementwise + reduce.
    if B < min_pallas_batch and not force_pallas:
        return jnp.sum(jnp.abs(emb_bs - emb_as), axis=1)

    # Lane repack: [B, H] -> [B/group, group*H] (free contiguous reshape) so the
    # lane axis is fully occupied.  Non-multiple-of-group batches are zero-padded;
    # padded rows contribute 0 and are sliced off below.
    group = _LANES // H if (H < _LANES and _LANES % H == 0) else 1
    pad = (-B) % group
    if pad:
        emb_as = jnp.pad(emb_as, ((0, pad), (0, 0)))
        emb_bs = jnp.pad(emb_bs, ((0, pad), (0, 0)))
    b_pad = B + pad
    rows, packed_h = b_pad // group, group * H
    a_p = emb_as.reshape(rows, packed_h)
    b_p = emb_bs.reshape(rows, packed_h)

    # Constant segment-sum matrix: seg[j, g] = 1 iff lane j belongs to packed row g.
    seg = (jnp.arange(packed_h)[:, None] // H
           == jnp.arange(group)[None, :]).astype(jnp.float32)

    # Batch tile in packed rows: full-batch block for small inputs, else tb_rows
    # (multiple of 8 for the sublane constraint; packed_h=128 satisfies the lane one).
    tb = rows if rows <= tb_rows else tb_rows
    assert tb == rows or tb % 8 == 0
    grid = (pl.cdiv(rows, tb),)

    # CORE_PARALLEL actually splits the batch axis across v7x's 2 TensorCores;
    # plain "parallel" is kept as the safe default for single-core v5e/v6e.
    sems = (pltpu.CORE_PARALLEL,) if core_parallel else ("parallel",)

    cost = pl.CostEstimate(
        flops=3 * b_pad * H + 2 * rows * packed_h * group,
        transcendentals=0,
        bytes_accessed=(2 * b_pad * H + rows * group + packed_h * group) * 4,
    )

    out = pl.pallas_call(
        _predict_kernel,
        out_shape=jax.ShapeDtypeStruct((rows, group), jnp.float32),
        grid=grid,
        in_specs=[
            pl.BlockSpec((tb, packed_h), lambda i: (i, 0)),
            pl.BlockSpec((tb, packed_h), lambda i: (i, 0)),
            pl.BlockSpec((packed_h, group), lambda i: (0, 0)),   # constant block
        ],
        out_specs=pl.BlockSpec((tb, group), lambda i: (i, 0)),
        compiler_params=pltpu.CompilerParams(dimension_semantics=sems),
        cost_estimate=cost,
    )(a_p, b_p, seg)

    # out[r, g] corresponds to original row r*group + g -> row-major flatten + trim.
    return out.reshape(b_pad)[:B]


if __name__ == "__main__":
    key = jax.random.PRNGKey(0)

    # Small shapes consistent with the module: two batches of graph embeddings [B, H].
    B, HIDDEN = 2, 32
    k1, k2, k3, k4 = jax.random.split(key, 4)
    emb_as = jax.random.normal(k1, (B, HIDDEN), dtype=jnp.float32)
    emb_bs = jax.random.normal(k2, (B, HIDDEN), dtype=jnp.float32)

    pred = gnn_embedder_forward(emb_as, emb_bs)
    ref = jnp.sum(jnp.abs(emb_bs - emb_as), axis=1)

    # Default path for tiny B is the fused-XLA fallback ...
    e_fb = jax.block_until_ready(gnn_embedder_predict(pred))
    # ... and the Pallas kernel is exercised once explicitly at the same small shape.
    e_pl = jax.block_until_ready(gnn_embedder_predict(pred, force_pallas=True))
    assert e_fb.shape == (B,) and e_pl.shape == (B,)
    assert jnp.allclose(e_fb, ref, atol=1e-5, rtol=1e-5), (e_fb, ref)
    assert jnp.allclose(e_pl, ref, atol=1e-5, rtol=1e-5), (e_pl, ref)

    # Larger, awkward batch (not a multiple of 4 or of the tile): exercises the
    # zero-pad repack, 3 pipelined grid steps at tb_rows=2048, and masked tail block.
    B2 = 20002
    a2 = jax.random.normal(k3, (B2, HIDDEN), dtype=jnp.float32)
    b2 = jax.random.normal(k4, (B2, HIDDEN), dtype=jnp.float32)
    e2 = jax.block_until_ready(
        gnn_embedder_predict(gnn_embedder_forward(a2, b2)))
    ref2 = jnp.sum(jnp.abs(b2 - a2), axis=1)
    assert e2.shape == (B2,)
    assert jnp.allclose(e2, ref2, atol=1e-4, rtol=1e-5), float(
        jnp.max(jnp.abs(e2 - ref2)))

    print("KERNEL_OK")
</pallas_src>

<mosaic_0001>
module attributes {stable_mosaic.version = 11 : i64} {
  func.func @_predict_kernel(%arg0: i32, %arg1: memref<1x128xf32, #tpu.memory_space<vmem>>, %arg2: memref<1x128xf32, #tpu.memory_space<vmem>>, %arg3: memref<128x4xf32, #tpu.memory_space<vmem>>, %arg4: memref<1x4xf32, #tpu.memory_space<vmem>>) attributes {dimension_semantics = [#tpu.dimension_semantics<parallel>], iteration_bounds = array<i64: 1>, scalar_prefetch = 0 : i64, scratch_operands = 0 : i64, tpu.core_type = #tpu.core_type<tc>, window_params = [{transform_indices = @transform_0, window_bounds = array<i64: 1, 128>}, {transform_indices = @transform_1, window_bounds = array<i64: 1, 128>}, {pipeline_mode = #tpu.pipeline_mode<synchronous>, transform_indices = @transform_2, window_bounds = array<i64: 128, 4>}, {transform_indices = @transform_3, window_bounds = array<i64: 1, 4>}]} {
    %c0 = arith.constant 0 : index
    %c0_0 = arith.constant 0 : index
    %0 = vector.load %arg2[%c0, %c0_0] : memref<1x128xf32, #tpu.memory_space<vmem>>, vector<1x128xf32>
    %c0_1 = arith.constant 0 : index
    %c0_2 = arith.constant 0 : index
    %1 = vector.load %arg1[%c0_1, %c0_2] : memref<1x128xf32, #tpu.memory_space<vmem>>, vector<1x128xf32>
    %2 = arith.subf %0, %1 : vector<1x128xf32>
    %3 = math.absf %2 : vector<1x128xf32>
    %c0_3 = arith.constant 0 : index
    %c0_4 = arith.constant 0 : index
    %4 = vector.load %arg3[%c0_3, %c0_4] : memref<128x4xf32, #tpu.memory_space<vmem>>, vector<128x4xf32>
    %cst = arith.constant dense<0.000000e+00> : vector<1x4xf32>
    %5 = tpu.matmul %3, %4, %cst {dimension_numbers = #tpu.dot_dimension_numbers<[1], [0], [0], [1], [0, 0, 1, 1], [], []>} : vector<1x128xf32>, vector<128x4xf32>, vector<1x4xf32> -> vector<1x4xf32>
    %c0_5 = arith.constant 0 : index
    %c0_6 = arith.constant 0 : index
    %6 = vector.load %arg4[%c0_5, %c0_6] : memref<1x4xf32, #tpu.memory_space<vmem>>, vector<1x4xf32>
    tpu.vector_store %arg4[%c0_5, %c0_6], %5 {strides = array<i32>} : memref<1x4xf32, #tpu.memory_space<vmem>>, vector<1x4xf32>,
    return
  }
  func.func @transform_0(%arg0: i32) -> (i32, i32) {
    %c0_i32 = arith.constant 0 : i32
    %c0_i32_0 = arith.constant 0 : i32
    return %arg0, %c0_i32 : i32, i32
  }
  func.func @transform_1(%arg0: i32) -> (i32, i32) {
    %c0_i32 = arith.constant 0 : i32
    %c0_i32_0 = arith.constant 0 : i32
    return %arg0, %c0_i32 : i32, i32
  }
  func.func @transform_2(%arg0: i32) -> (i32, i32) {
    %c0_i32 = arith.constant 0 : i32
    %c0_i32_0 = arith.constant 0 : i32
    %c0_i32_1 = arith.constant 0 : i32
    return %c0_i32, %c0_i32_0 : i32, i32
  }
  func.func @transform_3(%arg0: i32) -> (i32, i32) {
    %c0_i32 = arith.constant 0 : i32
    %c0_i32_0 = arith.constant 0 : i32
    return %arg0, %c0_i32 : i32, i32
  }
}

</mosaic_0001>

<llo_original>
// kernel: tpu_custom_call.1
$region0: #{tpu_custom_call.1}
  #allocation0 [shape = 'u32[]', space=smem, size = 0x4, offset = 0x4, fixed_abs, tag = 'smem constant byte address 0x4 - core index']
  #allocation1 [shape = 'u32[144,128]{1,0:T(1,128)}', space=vmem, size = 0x12000, scoped, tag = 'internal scratch']
  %s0 = inlined_call_operand.vmem [shape: f32[1,128], index: 0, kind: input, shape index: {}]
  %s1 = inlined_call_operand.vmem [shape: f32[1,128], index: 1, kind: input, shape index: {}]
  %s2 = inlined_call_operand.vmem [shape: f32[128,4], index: 2, kind: input, shape index: {}]
  %s3 = inlined_call_operand.hbm [shape: f32[1,4], index: 3, kind: output, shape index: {}]
  %s4 = sld [smem:[#allocation0]]
  $region22: #{tpu_custom_call.1} parent=0
    _
  %s6 = ssub.s32 1, %s4
  %s7 = scalar_select 0, %s6, %s4
  $region1: #{tpu_custom_call.1} parent=0
    #allocation2 [shape = 'u8[512]{0}', space=vmem, size = 0x400, scoped, tag = 'output window, operand 0, single buffered']
    #allocation3 [shape = 's32[1]{0}', space=sflag, size = 0x4, scoped, tag = 'scoped memory for tpu_custom_call.1']
    %8 = vsyncpa [#allocation3], 0
    // Predicated region
    $region2: #{tpu_custom_call.1} parent=1 // pred_check
      _
    $region3: #{tpu_custom_call.1} parent=1 // pred_check_branch
      %10 = sbr.rel (0) target = $region5
    $region4: #{tpu_custom_call.1} parent=1 // pred_region
      _
    $region5: #{tpu_custom_call.1} parent=1 // pred_fallthru
      _
    // Predicated region
    $region6: #{tpu_custom_call.1} parent=1 // pred_check
      _
    $region7: #{tpu_custom_call.1} parent=1 // pred_check_branch
      %12 = sbr.rel (0) target = $region9
    $region8: #{tpu_custom_call.1} parent=1 // pred_region
      _
    $region9: #{tpu_custom_call.1} parent=1 // pred_fallthru
      _
    // Predicated region
    $region10: #{tpu_custom_call.1} parent=1 // pred_check
      _
    $region11: #{tpu_custom_call.1} parent=1 // pred_check_branch
      %14 = sbr.rel (0) target = $region13
    $region12: #{tpu_custom_call.1} parent=1 // pred_region
      _
    $region13: #{tpu_custom_call.1} parent=1 // pred_fallthru
      _
    %v15 = vld [vmem:[%s1] sm:$0x1]
    %v16 = vld [vmem:[%s0] sm:$0x1]
    %v17 = vsub.f32 %v15, %v16
    %v18 = vand.u32 2147483647, %v17
    %v19 = vld [vmem:[%s2] sm:$0xff]
    %v20 = vld [vmem:[%s2 + $0x8] sm:$0xff]
    %v21 = vld [vmem:[%s2 + $0x10] sm:$0xff]
    %v22 = vld [vmem:[%s2 + $0x18] sm:$0xff]
    %v23 = vld [vmem:[%s2 + $0x20] sm:$0xff]
    %v24 = vld [vmem:[%s2 + $0x28] sm:$0xff]
    %v25 = vld [vmem:[%s2 + $0x30] sm:$0xff]
    %v26 = vld [vmem:[%s2 + $0x38] sm:$0xff]
    %v27 = vld [vmem:[%s2 + $0x40] sm:$0xff]
    %v28 = vld [vmem:[%s2 + $0x48] sm:$0xff]
    %v29 = vld [vmem:[%s2 + $0x50] sm:$0xff]
    %v30 = vld [vmem:[%s2 + $0x58] sm:$0xff]
    %v31 = vld [vmem:[%s2 + $0x60] sm:$0xff]
    %v32 = vld [vmem:[%s2 + $0x68] sm:$0xff]
    %v33 = vld [vmem:[%s2 + $0x70] sm:$0xff]
    %v34 = vld [vmem:[%s2 + $0x78] sm:$0xff]
    %35 = vmatprep.subr.mxu0 0.0
    %36 = vmatpush1.msra.mxu0 %v19
    %37 = vmatprep.subr.mxu0 0.0
    %38 = vmatpush1.msra.mxu0 %v20
    %39 = vmatprep.subr.mxu0 0.0
    %40 = vmatpush1.msra.mxu0 %v21
    %41 = vmatprep.subr.mxu0 0.0
    %42 = vmatpush1.msra.mxu0 %v22
    %43 = vmatprep.subr.mxu0 0.0
    %44 = vmatpush1.msra.mxu0 %v23
    %45 = vmatprep.subr.mxu0 0.0
    %46 = vmatpush1.msra.mxu0 %v24
    %47 = vmatprep.subr.mxu0 0.0
    %48 = vmatpush1.msra.mxu0 %v25
    %49 = vmatprep.subr.mxu0 0.0
    %50 = vmatpush1.msra.mxu0 %v26
    %51 = vmatprep.subr.mxu0 0.0
    %52 = vmatpush1.msra.mxu0 %v27
    %53 = vmatprep.subr.mxu0 0.0
    %54 = vmatpush1.msra.mxu0 %v28
    %55 = vmatprep.subr.mxu0 0.0
    %56 = vmatpush1.msra.mxu0 %v29
    %57 = vmatprep.subr.mxu0 0.0
    %58 = vmatpush1.msra.mxu0 %v30
    %59 = vmatprep.subr.mxu0 0.0
    %60 = vmatpush1.msra.mxu0 %v31
    %61 = vmatprep.subr.mxu0 0.0
    %62 = vmatpush1.msra.mxu0 %v32
    %63 = vmatprep.subr.mxu0 0.0
    %64 = vmatpush1.msra.mxu0 %v33
    %65 = vmatprep.subr.mxu0 0.0
    %66 = vmatpush1.msra.mxu0 %v34
    %67 = vmatprep.subr.mxu0 0.0
    %68 = vmatpush1.msra.mxu0 0.0
    %69 = vmatprep.subr.mxu0 0.0
    %70 = vmatpush1.msra.mxu0 0.0
    %71 = vmatprep.subr.mxu0 0.0
    %72 = vmatpush1.msra.mxu0 0.0
    %73 = vmatprep.subr.mxu0 0.0
    %74 = vmatpush1.msra.mxu0 0.0
    %75 = vmatprep.subr.mxu0 0.0
    %76 = vmatpush1.msra.mxu0 0.0
    %77 = vmatprep.subr.mxu0 0.0
    %78 = vmatpush1.msra.mxu0 0.0
    %79 = vmatprep.subr.mxu0 0.0
    %80 = vmatpush1.msra.mxu0 0.0
    %81 = vmatprep.subr.mxu0 0.0
    %82 = vmatpush1.msra.mxu0 0.0
    %83 = vmatprep.subr.mxu0 0.0
    %84 = vmatpush1.msra.mxu0 0.0
    %85 = vmatprep.subr.mxu0 0.0
    %86 = vmatpush1.msra.mxu0 0.0
    %87 = vmatprep.subr.mxu0 0.0
    %88 = vmatpush1.msra.mxu0 0.0
    %89 = vmatprep.subr.mxu0 0.0
    %90 = vmatpush1.msra.mxu0 0.0
    %91 = vmatprep.subr.mxu0 0.0
    %92 = vmatpush1.msra.mxu0 0.0
    %93 = vmatprep.subr.mxu0 0.0
    %94 = vmatpush1.msra.mxu0 0.0
    %95 = vmatprep.subr.mxu0 0.0
    %96 = vmatpush1.msra.mxu0 0.0
    %97 = vmatprep.subr.mxu0 0.0
    %98 = vmatpush1.msra.mxu0 0.0
    %99 = vmatprep.mubr.f32.mxu0 0.0
    %100 = vmatmul.mubr.f32.gmra.mrb[0].mxu0 %v18
    %v101 = vpop.f32.mrb[0].mxu0
    %v102 = vadd.f32 0.0, %v101
    %v103 = vpop.f32.mrb[0].mxu0
    %104 = vdwg.mxu0
    %vm105 = vcmask 24576
    %106 = vst.msk [vmem:[#allocation2] sm:$0x1] %vm105, %v102
    // Predicated region
    $region14: #{tpu_custom_call.1} parent=1 // pred_check
      _
    $region15: #{tpu_custom_call.1} parent=1 // pred_check_branch
      %108 = sbr.rel (0) target = $region17
    $region16: #{tpu_custom_call.1} parent=1 // pred_region
      %s110 = ssub.s32 16, 16
      %111 = vsyncadd [#allocation3], %s110
      %s113 = sshll.u32 [#allocation2], 4
      %s114 = int_to_ptr.vmem [resolvable:$true] %s113
      %116 = dma.vmem_to_hbm [thread:$0]  %s114, 16, %s3, [#allocation3]
    $region17: #{tpu_custom_call.1} parent=1 // pred_fallthru
      _
    // Predicated region
    $region18: #{tpu_custom_call.1} parent=1 // pred_check
      _
    $region19: #{tpu_custom_call.1} parent=1 // pred_check_branch
      %118 = sbr.rel (0) target = $region21
    $region20: #{tpu_custom_call.1} parent=1 // pred_region
      %119 = dma.done [#allocation3], 16
    $region21: #{tpu_custom_call.1} parent=1 // pred_fallthru
      _
    %120 = vsyncpa [#allocation3], 1

</llo_original>
